<compile_context>
chip_gen: v5e
topology: v5e:2x2
jax: 0.10.0
libtpu: 0.0.40
codegen_flags: <defaults>
</compile_context>

<pallas_src>
import jax
import jax.numpy as jnp
from jax import lax
from jax.experimental import pallas as pl
from jax.experimental.pallas import tpu as pltpu
from functools import partial


# ----------------------------------------------------------------------------
# Kernel 1: QKV projection  (x @ Wq/Wk/Wv + b, Q pre-scaled via folded weights)
# ----------------------------------------------------------------------------
def _qkv_proj_kernel(x_ref, wq_ref, wk_ref, wv_ref, bq_ref, bk_ref, bv_ref,
                     q_ref, k_ref, v_ref):
    x = x_ref[...]                                               # (ts, E) bf16
    q = jnp.dot(x, wq_ref[...], preferred_element_type=jnp.float32) + bq_ref[...]
    k = jnp.dot(x, wk_ref[...], preferred_element_type=jnp.float32) + bk_ref[...]
    v = jnp.dot(x, wv_ref[...], preferred_element_type=jnp.float32) + bv_ref[...]
    q_ref[...] = q.astype(q_ref.dtype)
    k_ref[...] = k.astype(k_ref.dtype)
    v_ref[...] = v.astype(v_ref.dtype)


# ----------------------------------------------------------------------------
# Kernel 2: flash attention (online softmax over k-tiles) + output projection
# ----------------------------------------------------------------------------
def _flash_attn_out_kernel(q_ref, k_ref, v_ref, wout_ref, bout_ref, o_ref,
                           m_ref, l_ref, acc_ref, *, num_heads, head_dim):
    ki = pl.program_id(2)

    @pl.when(ki == 0)
    def _init():
        m_ref[...] = jnp.full_like(m_ref, -jnp.inf)
        l_ref[...] = jnp.zeros_like(l_ref)
        acc_ref[...] = jnp.zeros_like(acc_ref)

    q = q_ref[...]                                               # (tq, E) bf16
    k = k_ref[...]                                               # (tk, E) bf16
    v = v_ref[...]                                               # (tk, E) bf16

    # Per-head online softmax; heads are static lane slices of the (tile, E)
    # layout -- no transpose/reshape relayouts.
    for h in range(num_heads):
        hs = slice(h * head_dim, (h + 1) * head_dim)
        # (tq, Dh) x (tk, Dh)^T -> (tq, tk), f32 accumulation on the MXU.
        s = lax.dot_general(q[:, hs], k[:, hs],
                            (((1,), (1,)), ((), ())),
                            preferred_element_type=jnp.float32)
        m_prev = m_ref[:, h:h + 1]                               # (tq, 1)
        m_new = jnp.maximum(m_prev, jnp.max(s, axis=-1, keepdims=True))
        alpha = jnp.exp(m_prev - m_new)                          # (tq, 1) f32
        p = jnp.exp(s - m_new)                                   # (tq, tk) f32
        l_ref[:, h:h + 1] = alpha * l_ref[:, h:h + 1] + \
            jnp.sum(p, axis=-1, keepdims=True)
        acc_ref[:, hs] = alpha * acc_ref[:, hs] + jnp.dot(
            p.astype(v.dtype), v[:, hs], preferred_element_type=jnp.float32)
        m_ref[:, h:h + 1] = m_new

    @pl.when(ki == pl.num_programs(2) - 1)
    def _finalize():
        # Deferred normalization: divide the accumulated context (not the
        # (tq, tk) probabilities) using the EUP reciprocal.
        inv_l = pl.reciprocal(l_ref[...], approx=True)           # (tq, H) f32
        for h in range(num_heads):
            hs = slice(h * head_dim, (h + 1) * head_dim)
            acc_ref[:, hs] = acc_ref[:, hs] * inv_l[:, h:h + 1]
        ctx = acc_ref[...].astype(jnp.bfloat16)                  # (tq, E)
        out = jnp.dot(ctx, wout_ref[...],
                      preferred_element_type=jnp.float32) + bout_ref[...]
        o_ref[...] = out.astype(o_ref.dtype)


# ----------------------------------------------------------------------------
# Helpers
# ----------------------------------------------------------------------------
def _pick_tile(dim, target):
    """Largest divisor of `dim` that is <= target (== dim when dim <= target)."""
    t = min(dim, target)
    while dim % t:
        t -= 1
    return t


def _vmem_limit_bytes():
    # Generation-aware scoped-VMEM budget: v7x has 64 MiB physical VMEM,
    # v5e/v6e have 128 MiB.  Stay well under physical, above the 16/32 MiB
    # defaults so larger tiles still pipeline.
    try:
        cap = pltpu.get_tpu_info().vmem_capacity_bytes
        return min(int(cap * 3 // 4), 100 * 1024 * 1024)
    except Exception:  # pragma: no cover - conservative fallback (v7x-safe)
        return 48 * 1024 * 1024


# ----------------------------------------------------------------------------
# Wrapper
# ----------------------------------------------------------------------------
def self_attention(x, w_qkv, b_qkv, w_out, b_out, *, num_heads,
                   tile_seq=256):
    B, S, E = x.shape
    assert E % num_heads == 0, "embed_dim must be divisible by num_heads"
    head_dim = E // num_heads
    scale = 1.0 / (head_dim ** 0.5)

    # Split the fused QKV weights; fold the softmax scale into the Q projection.
    w_q = (w_qkv[:, 0 * E:1 * E] * scale).astype(jnp.bfloat16)
    w_k = w_qkv[:, 1 * E:2 * E].astype(jnp.bfloat16)
    w_v = w_qkv[:, 2 * E:3 * E].astype(jnp.bfloat16)
    b_q = (b_qkv[0 * E:1 * E] * scale).astype(jnp.float32).reshape(1, E)
    b_k = b_qkv[1 * E:2 * E].astype(jnp.float32).reshape(1, E)
    b_v = b_qkv[2 * E:3 * E].astype(jnp.float32).reshape(1, E)
    w_out_bf = w_out.astype(jnp.bfloat16)
    b_out2 = b_out.astype(jnp.float32).reshape(1, E)
    x_bf = x.astype(jnp.bfloat16)

    ts = _pick_tile(S, tile_seq)          # projection seq tile
    tq = ts                               # query tile
    tk = _pick_tile(S, tile_seq)          # key/value tile
    vmem_limit = _vmem_limit_bytes()

    # ---- Pass 1: QKV projection (bf16 MXU, f32 accumulate) -------------------
    q, k, v = pl.pallas_call(
        _qkv_proj_kernel,
        out_shape=(
            jax.ShapeDtypeStruct((B, S, E), jnp.bfloat16),
            jax.ShapeDtypeStruct((B, S, E), jnp.bfloat16),
            jax.ShapeDtypeStruct((B, S, E), jnp.bfloat16),
        ),
        grid_spec=pltpu.PrefetchScalarGridSpec(
            num_scalar_prefetch=0,
            grid=(B, S // ts),
            in_specs=[
                pl.BlockSpec((None, ts, E), lambda b, si: (b, si, 0)),  # x
                pl.BlockSpec((E, E), lambda b, si: (0, 0)),             # Wq
                pl.BlockSpec((E, E), lambda b, si: (0, 0)),             # Wk
                pl.BlockSpec((E, E), lambda b, si: (0, 0)),             # Wv
                pl.BlockSpec((1, E), lambda b, si: (0, 0)),             # bq
                pl.BlockSpec((1, E), lambda b, si: (0, 0)),             # bk
                pl.BlockSpec((1, E), lambda b, si: (0, 0)),             # bv
            ],
            out_specs=[
                pl.BlockSpec((None, ts, E), lambda b, si: (b, si, 0)),
                pl.BlockSpec((None, ts, E), lambda b, si: (b, si, 0)),
                pl.BlockSpec((None, ts, E), lambda b, si: (b, si, 0)),
            ],
        ),
        compiler_params=pltpu.CompilerParams(
            dimension_semantics=("parallel", "parallel"),
            vmem_limit_bytes=vmem_limit),
    )(x_bf, w_q, w_k, w_v, b_q, b_k, b_v)

    # ---- Pass 2: flash attention + output projection -------------------------
    kernel = partial(_flash_attn_out_kernel,
                     num_heads=num_heads, head_dim=head_dim)

    out = pl.pallas_call(
        kernel,
        out_shape=jax.ShapeDtypeStruct((B, S, E), x.dtype),
        grid_spec=pltpu.PrefetchScalarGridSpec(
            num_scalar_prefetch=0,
            grid=(B, S // tq, S // tk),
            in_specs=[
                pl.BlockSpec((None, tq, E), lambda b, qi, ki: (b, qi, 0)),  # q
                pl.BlockSpec((None, tk, E), lambda b, qi, ki: (b, ki, 0)),  # k
                pl.BlockSpec((None, tk, E), lambda b, qi, ki: (b, ki, 0)),  # v
                pl.BlockSpec((E, E), lambda b, qi, ki: (0, 0)),             # W_out
                pl.BlockSpec((1, E), lambda b, qi, ki: (0, 0)),             # b_out
            ],
            out_specs=pl.BlockSpec((None, tq, E), lambda b, qi, ki: (b, qi, 0)),
            scratch_shapes=[
                pltpu.VMEM((tq, num_heads), jnp.float32),   # running max
                pltpu.VMEM((tq, num_heads), jnp.float32),   # running denom
                pltpu.VMEM((tq, E), jnp.float32),           # context accumulator
            ],
        ),
        compiler_params=pltpu.CompilerParams(
            dimension_semantics=("parallel", "parallel", "arbitrary"),
            vmem_limit_bytes=vmem_limit),
    )(q, k, v, w_out_bf, b_out2)

    return out


# ----------------------------------------------------------------------------
# Pure-JAX reference mirroring the PyTorch forward (f32 throughout).
# ----------------------------------------------------------------------------
def self_attention_ref(x, w_qkv, b_qkv, w_out, b_out, *, num_heads):
    B, S, E = x.shape
    Dh = E // num_heads
    qkv = x @ w_qkv + b_qkv
    q, k, v = jnp.split(qkv, 3, axis=-1)

    def heads(t):
        return jnp.transpose(t.reshape(B, S, num_heads, Dh), (0, 2, 1, 3))

    q, k, v = heads(q), heads(k), heads(v)
    scores = jnp.einsum('bhqd,bhkd->bhqk', q, k) / (Dh ** 0.5)
    attn = jax.nn.softmax(scores, axis=-1)
    ctx = jnp.einsum('bhqk,bhkd->bhqd', attn, v)
    ctx = jnp.transpose(ctx, (0, 2, 1, 3)).reshape(B, S, E)
    return ctx @ w_out + b_out


if __name__ == "__main__":
    # Small, module-consistent shapes: batch=2, seq=8, embed_dim=32, heads=4.
    B, S, E, H = 2, 8, 32, 4

    key = jax.random.PRNGKey(0)
    kx, k1, k2, k3, k4 = jax.random.split(key, 5)

    bound = 1.0 / (E ** 0.5)
    w_qkv = jax.random.uniform(k1, (E, 3 * E), jnp.float32, -bound, bound)
    b_qkv = jax.random.uniform(k2, (3 * E,), jnp.float32, -bound, bound)
    w_out = jax.random.uniform(k3, (E, E), jnp.float32, -bound, bound)
    b_out = jax.random.uniform(k4, (E,), jnp.float32, -bound, bound)

    x = jax.random.normal(kx, (B, S, E), jnp.float32)

    out = self_attention(x, w_qkv, b_qkv, w_out, b_out, num_heads=H)
    out = jax.block_until_ready(out)

    ref = self_attention_ref(x, w_qkv, b_qkv, w_out, b_out, num_heads=H)
    assert out.shape == (B, S, E)
    # bf16 MXU inputs + approx reciprocal => looser tolerance than pure-f32.
    assert jnp.allclose(out, ref, atol=5e-2, rtol=5e-2), (
        "mismatch vs reference; max abs diff = "
        f"{float(jnp.max(jnp.abs(out - ref)))}")

    print("KERNEL_OK")
</pallas_src>

<mosaic_0001>
module attributes {stable_mosaic.version = 11 : i64} {
  func.func @_qkv_proj_kernel(%arg0: i32, %arg1: i32, %arg2: memref<1x8x32xbf16, #tpu.memory_space<vmem>>, %arg3: memref<32x32xbf16, #tpu.memory_space<vmem>>, %arg4: memref<32x32xbf16, #tpu.memory_space<vmem>>, %arg5: memref<32x32xbf16, #tpu.memory_space<vmem>>, %arg6: memref<1x32xf32, #tpu.memory_space<vmem>>, %arg7: memref<1x32xf32, #tpu.memory_space<vmem>>, %arg8: memref<1x32xf32, #tpu.memory_space<vmem>>, %arg9: memref<1x8x32xbf16, #tpu.memory_space<vmem>>, %arg10: memref<1x8x32xbf16, #tpu.memory_space<vmem>>, %arg11: memref<1x8x32xbf16, #tpu.memory_space<vmem>>) attributes {dimension_semantics = [#tpu.dimension_semantics<parallel>, #tpu.dimension_semantics<parallel>], iteration_bounds = array<i64: 2, 1>, scalar_prefetch = 0 : i64, scratch_operands = 0 : i64, tpu.core_type = #tpu.core_type<tc>, window_params = [{transform_indices = @transform_0, window_bounds = array<i64: 1, 8, 32>}, {pipeline_mode = #tpu.pipeline_mode<synchronous>, transform_indices = @transform_1, window_bounds = array<i64: 32, 32>}, {pipeline_mode = #tpu.pipeline_mode<synchronous>, transform_indices = @transform_2, window_bounds = array<i64: 32, 32>}, {pipeline_mode = #tpu.pipeline_mode<synchronous>, transform_indices = @transform_3, window_bounds = array<i64: 32, 32>}, {pipeline_mode = #tpu.pipeline_mode<synchronous>, transform_indices = @transform_4, window_bounds = array<i64: 1, 32>}, {pipeline_mode = #tpu.pipeline_mode<synchronous>, transform_indices = @transform_5, window_bounds = array<i64: 1, 32>}, {pipeline_mode = #tpu.pipeline_mode<synchronous>, transform_indices = @transform_6, window_bounds = array<i64: 1, 32>}, {transform_indices = @transform_7, window_bounds = array<i64: 1, 8, 32>}, {transform_indices = @transform_8, window_bounds = array<i64: 1, 8, 32>}, {transform_indices = @transform_9, window_bounds = array<i64: 1, 8, 32>}]} {
    %c0 = arith.constant 0 : index
    %c0_0 = arith.constant 0 : index
    %c0_1 = arith.constant 0 : index
    %0 = vector.load %arg2[%c0, %c0_0, %c0_1] : memref<1x8x32xbf16, #tpu.memory_space<vmem>>, vector<1x8x32xbf16>
    %1 = vector.shape_cast %0 : vector<1x8x32xbf16> to vector<8x32xbf16>
    %c0_2 = arith.constant 0 : index
    %c0_3 = arith.constant 0 : index
    %2 = vector.load %arg3[%c0_2, %c0_3] : memref<32x32xbf16, #tpu.memory_space<vmem>>, vector<32x32xbf16>
    %cst = arith.constant dense<0.000000e+00> : vector<8x32xf32>
    %3 = tpu.matmul %1, %2, %cst {dimension_numbers = #tpu.dot_dimension_numbers<[1], [0], [0], [1], [0, 0, 1, 1], [], []>} : vector<8x32xbf16>, vector<32x32xbf16>, vector<8x32xf32> -> vector<8x32xf32>
    %c0_4 = arith.constant 0 : index
    %c0_5 = arith.constant 0 : index
    %4 = vector.load %arg6[%c0_4, %c0_5] : memref<1x32xf32, #tpu.memory_space<vmem>>, vector<1x32xf32>
    %5 = vector.broadcast %4 : vector<1x32xf32> to vector<8x32xf32>
    %6 = arith.addf %3, %5 : vector<8x32xf32>
    %c0_6 = arith.constant 0 : index
    %c0_7 = arith.constant 0 : index
    %7 = vector.load %arg4[%c0_6, %c0_7] : memref<32x32xbf16, #tpu.memory_space<vmem>>, vector<32x32xbf16>
    %cst_8 = arith.constant dense<0.000000e+00> : vector<8x32xf32>
    %8 = tpu.matmul %1, %7, %cst_8 {dimension_numbers = #tpu.dot_dimension_numbers<[1], [0], [0], [1], [0, 0, 1, 1], [], []>} : vector<8x32xbf16>, vector<32x32xbf16>, vector<8x32xf32> -> vector<8x32xf32>
    %c0_9 = arith.constant 0 : index
    %c0_10 = arith.constant 0 : index
    %9 = vector.load %arg7[%c0_9, %c0_10] : memref<1x32xf32, #tpu.memory_space<vmem>>, vector<1x32xf32>
    %10 = vector.broadcast %9 : vector<1x32xf32> to vector<8x32xf32>
    %11 = arith.addf %8, %10 : vector<8x32xf32>
    %c0_11 = arith.constant 0 : index
    %c0_12 = arith.constant 0 : index
    %12 = vector.load %arg5[%c0_11, %c0_12] : memref<32x32xbf16, #tpu.memory_space<vmem>>, vector<32x32xbf16>
    %cst_13 = arith.constant dense<0.000000e+00> : vector<8x32xf32>
    %13 = tpu.matmul %1, %12, %cst_13 {dimension_numbers = #tpu.dot_dimension_numbers<[1], [0], [0], [1], [0, 0, 1, 1], [], []>} : vector<8x32xbf16>, vector<32x32xbf16>, vector<8x32xf32> -> vector<8x32xf32>
    %c0_14 = arith.constant 0 : index
    %c0_15 = arith.constant 0 : index
    %14 = vector.load %arg8[%c0_14, %c0_15] : memref<1x32xf32, #tpu.memory_space<vmem>>, vector<1x32xf32>
    %15 = vector.broadcast %14 : vector<1x32xf32> to vector<8x32xf32>
    %16 = arith.addf %13, %15 : vector<8x32xf32>
    %17 = arith.truncf %6 : vector<8x32xf32> to vector<8x32xbf16>
    %c0_16 = arith.constant 0 : index
    %c0_17 = arith.constant 0 : index
    %c0_18 = arith.constant 0 : index
    %18 = vector.load %arg9[%c0_16, %c0_17, %c0_18] : memref<1x8x32xbf16, #tpu.memory_space<vmem>>, vector<1x8x32xbf16>
    %19 = vector.shape_cast %18 : vector<1x8x32xbf16> to vector<8x32xbf16>
    %20 = vector.shape_cast %17 : vector<8x32xbf16> to vector<1x8x32xbf16>
    tpu.vector_store %arg9[%c0_16, %c0_17, %c0_18], %20 {strides = array<i32>} : memref<1x8x32xbf16, #tpu.memory_space<vmem>>, vector<1x8x32xbf16>,
    %21 = arith.truncf %11 : vector<8x32xf32> to vector<8x32xbf16>
    %c0_19 = arith.constant 0 : index
    %c0_20 = arith.constant 0 : index
    %c0_21 = arith.constant 0 : index
    %22 = vector.load %arg10[%c0_19, %c0_20, %c0_21] : memref<1x8x32xbf16, #tpu.memory_space<vmem>>, vector<1x8x32xbf16>
    %23 = vector.shape_cast %22 : vector<1x8x32xbf16> to vector<8x32xbf16>
    %24 = vector.shape_cast %21 : vector<8x32xbf16> to vector<1x8x32xbf16>
    tpu.vector_store %arg10[%c0_19, %c0_20, %c0_21], %24 {strides = array<i32>} : memref<1x8x32xbf16, #tpu.memory_space<vmem>>, vector<1x8x32xbf16>,
    %25 = arith.truncf %16 : vector<8x32xf32> to vector<8x32xbf16>
    %c0_22 = arith.constant 0 : index
    %c0_23 = arith.constant 0 : index
    %c0_24 = arith.constant 0 : index
    %26 = vector.load %arg11[%c0_22, %c0_23, %c0_24] : memref<1x8x32xbf16, #tpu.memory_space<vmem>>, vector<1x8x32xbf16>
    %27 = vector.shape_cast %26 : vector<1x8x32xbf16> to vector<8x32xbf16>
    %28 = vector.shape_cast %25 : vector<8x32xbf16> to vector<1x8x32xbf16>
    tpu.vector_store %arg11[%c0_22, %c0_23, %c0_24], %28 {strides = array<i32>} : memref<1x8x32xbf16, #tpu.memory_space<vmem>>, vector<1x8x32xbf16>,
    return
  }
  func.func @transform_0(%arg0: i32, %arg1: i32) -> (i32, i32, i32) {
    %c0_i32 = arith.constant 0 : i32
    %c0_i32_0 = arith.constant 0 : i32
    return %arg0, %arg1, %c0_i32 : i32, i32, i32
  }
  func.func @transform_1(%arg0: i32, %arg1: i32) -> (i32, i32) {
    %c0_i32 = arith.constant 0 : i32
    %c0_i32_0 = arith.constant 0 : i32
    %c0_i32_1 = arith.constant 0 : i32
    return %c0_i32, %c0_i32_0 : i32, i32
  }
  func.func @transform_2(%arg0: i32, %arg1: i32) -> (i32, i32) {
    %c0_i32 = arith.constant 0 : i32
    %c0_i32_0 = arith.constant 0 : i32
    %c0_i32_1 = arith.constant 0 : i32
    return %c0_i32, %c0_i32_0 : i32, i32
  }
  func.func @transform_3(%arg0: i32, %arg1: i32) -> (i32, i32) {
    %c0_i32 = arith.constant 0 : i32
    %c0_i32_0 = arith.constant 0 : i32
    %c0_i32_1 = arith.constant 0 : i32
    return %c0_i32, %c0_i32_0 : i32, i32
  }
  func.func @transform_4(%arg0: i32, %arg1: i32) -> (i32, i32) {
    %c0_i32 = arith.constant 0 : i32
    %c0_i32_0 = arith.constant 0 : i32
    %c0_i32_1 = arith.constant 0 : i32
    return %c0_i32, %c0_i32_0 : i32, i32
  }
  func.func @transform_5(%arg0: i32, %arg1: i32) -> (i32, i32) {
    %c0_i32 = arith.constant 0 : i32
    %c0_i32_0 = arith.constant 0 : i32
    %c0_i32_1 = arith.constant 0 : i32
    return %c0_i32, %c0_i32_0 : i32, i32
  }
  func.func @transform_6(%arg0: i32, %arg1: i32) -> (i32, i32) {
    %c0_i32 = arith.constant 0 : i32
    %c0_i32_0 = arith.constant 0 : i32
    %c0_i32_1 = arith.constant 0 : i32
    return %c0_i32, %c0_i32_0 : i32, i32
  }
  func.func @transform_7(%arg0: i32, %arg1: i32) -> (i32, i32, i32) {
    %c0_i32 = arith.constant 0 : i32
    %c0_i32_0 = arith.constant 0 : i32
    return %arg0, %arg1, %c0_i32 : i32, i32, i32
  }
  func.func @transform_8(%arg0: i32, %arg1: i32) -> (i32, i32, i32) {
    %c0_i32 = arith.constant 0 : i32
    %c0_i32_0 = arith.constant 0 : i32
    return %arg0, %arg1, %c0_i32 : i32, i32, i32
  }
  func.func @transform_9(%arg0: i32, %arg1: i32) -> (i32, i32, i32) {
    %c0_i32 = arith.constant 0 : i32
    %c0_i32_0 = arith.constant 0 : i32
    return %arg0, %arg1, %c0_i32 : i32, i32, i32
  }
}

</mosaic_0001>

<llo_original>
// kernel: tpu_custom_call.1
$region0: #{tpu_custom_call.1}
  #allocation0 [shape = 'u32[]', space=smem, size = 0x4, offset = 0x4, fixed_abs, tag = 'smem constant byte address 0x4 - core index']
  #allocation1 [shape = 'u32[72,128]{1,0:T(1,128)}', space=vmem, size = 0x9000, scoped, tag = 'internal scratch']
  %s0 = inlined_call_operand.hbm [shape: bf16[2,8,32], index: 0, kind: input, shape index: {}]
  %s1 = inlined_call_operand.hbm [shape: bf16[32,32], index: 1, kind: input, shape index: {}]
  %s2 = inlined_call_operand.hbm [shape: bf16[32,32], index: 2, kind: input, shape index: {}]
  %s3 = inlined_call_operand.hbm [shape: bf16[32,32], index: 3, kind: input, shape index: {}]
  %s4 = inlined_call_operand.vmem [shape: f32[1,32], index: 4, kind: input, shape index: {}]
  %s5 = inlined_call_operand.vmem [shape: f32[1,32], index: 5, kind: input, shape index: {}]
  %s6 = inlined_call_operand.vmem [shape: f32[1,32], index: 6, kind: input, shape index: {}]
  %s7 = inlined_call_operand.hbm [shape: bf16[2,8,32], index: 7, kind: output, shape index: {0}]
  %s8 = inlined_call_operand.hbm [shape: bf16[2,8,32], index: 8, kind: output, shape index: {1}]
  %s9 = inlined_call_operand.hbm [shape: bf16[2,8,32], index: 9, kind: output, shape index: {2}]
  %10 = xla_tuple %s7, %s8, %s9
  %s11 = sld [smem:[#allocation0]]
  $region93: #{tpu_custom_call.1} parent=0
    _
  %s13 = ssub.s32 1, %s11
  %s14 = scalar_select 0, %s13, %s11
  $region1: #{tpu_custom_call.1} parent=0
    #allocation2 [shape = 'u8[4096]{0}', space=vmem, size = 0x1000, scoped, tag = 'input window, operand 0']
    #allocation3 [shape = 's32[2]{0}', space=sflag, size = 0x8, scoped, tag = 'scoped memory for tpu_custom_call.1']
    #allocation4 [shape = 's32[2]{0}', space=sflag, size = 0x8, scoped, tag = 'scoped memory for tpu_custom_call.1']
    #allocation5 [shape = 'u8[8192]{0}', space=vmem, size = 0x2000, scoped, tag = 'input window, operand 1, single buffered']
    #allocation6 [shape = 's32[1]{0}', space=sflag, size = 0x4, scoped, tag = 'scoped memory for tpu_custom_call.1']
    #allocation7 [shape = 'u8[8192]{0}', space=vmem, size = 0x2000, scoped, tag = 'input window, operand 2, single buffered']
    #allocation8 [shape = 'u8[8192]{0}', space=vmem, size = 0x2000, scoped, tag = 'input window, operand 3, single buffered']
    #allocation9 [shape = 's32[1]{0}', space=sflag, size = 0x4, scoped, tag = 'scoped memory for tpu_custom_call.1']
    #allocation10 [shape = 'u8[4096]{0}', space=vmem, size = 0x1000, scoped, tag = 'output window, operand 0']
    #allocation11 [shape = 'u8[4096]{0}', space=vmem, size = 0x1000, scoped, tag = 'output window, operand 1']
    #allocation12 [shape = 's32[2]{0}', space=sflag, size = 0x8, scoped, tag = 'scoped memory for tpu_custom_call.1']
    #allocation13 [shape = 'u8[4096]{0}', space=vmem, size = 0x1000, scoped, tag = 'output window, operand 2']
    %15 = vsyncpa [#allocation3], 0
    %s16 = scalar_lea.sflag [#allocation3], 1
    %17 = vsyncpa %s16, 0
    %18 = vsyncpa [#allocation6], 0
    %19 = vsyncpa [#allocation9], 0
    %20 = vsyncpa [#allocation4], 0
    %s21 = scalar_lea.sflag [#allocation4], 1
    %22 = vsyncpa %s21, 0
    %23 = vsyncpa [#allocation12], 0
    %s24 = scalar_lea.sflag [#allocation12], 1
    %25 = vsyncpa %s24, 0
    loop: start=0, step=1, limit=4
    $region2: #{tpu_custom_call.1} parent=1 // loop_pre_header
      _
    $region3: #{tpu_custom_call.1} parent=1 // loop_header
      %s27 = sphi 0, %s31
      %p28 = scmp.ge.s32.totalorder %s27, 4
      %s34 = sphi 0, %s46
      %s35 = sphi 0, %s42
      %s36 = sphi 0, %s34
      %s37 = sphi 0, %s35
      %s38 = sphi 0, %s36
      %s39 = sphi 0, %s37
      %s51 = sphi 0, %s53
      %s54 = sphi 0, %s51
      %s55 = sphi 0, %s54
      %s71 = sphi 0, %s55
      %s75 = sphi 0, %s75
      %s77 = sphi 0, %s75
      %s78 = sphi 0, %s77
      %s92 = sphi 0, %s78
      %s96 = sphi 0, %s96
      %s98 = sphi 0, %s96
      %s99 = sphi 0, %s98
      %s113 = sphi 0, %s99
      %s117 = sphi 0, %s117
      %s119 = sphi 0, %s117
      %s120 = sphi 0, %s119
      %s134 = sphi 0, %s120
      %s138 = sphi 0, %s138
      %s140 = sphi 0, %s138
      %s141 = sphi 0, %s140
      %s155 = sphi 0, %s141
      %s159 = sphi 0, %s159
      %s161 = sphi 0, %s159
      %s162 = sphi 0, %s161
      %s176 = sphi 0, %s162
      %s180 = sphi 0, %s180
      %s182 = sphi 0, %s180
      %s183 = sphi 0, %s182
      %s197 = sphi 0, %s183
      %s205 = sphi 0, %s207
      %s208 = sphi 0, %s205
      %s209 = sphi 0, %s208
      %s225 = sphi 0, %s209
      %s233 = sphi 0, %s235
      %s236 = sphi 0, %s233
      %s237 = sphi 0, %s236
      %s253 = sphi 0, %s237
      %s261 = sphi 0, %s263
      %s264 = sphi 0, %s261
      %s265 = sphi 0, %s264
      %s281 = sphi 0, %s265
    $region4: #{tpu_custom_call.1} parent=1 // loop_header_branch
      %30 = sbr.rel (%p28) target = $region8
    $region5: #{tpu_custom_call.1} parent=1 // loop_body
      %s32 = ssub.s32 %s27, 1
      %s33 = ssub.s32 %s27, 2
      %s40 = sadd.s32 1, %s35
      %p41 = scmp.ge.s32.totalorder %s40, 1
      %s42 = scalar_select %p41, 0, %s40
      %s43 = sadd.s32 1, %s34
      %s44 = scalar_select %p41, %s43, %s34
      %p45 = scmp.ge.s32.totalorder %s44, 2
      %s46 = scalar_select %p45, 0, %s44
      %s47 = ssub.s32 %s34, %s46
      %s48 = ssub.s32 %s35, %s42
      %s49 = sor.u32 %s47, %s48
      %p50 = scmp.eq.s32.totalorder %s49, 0
      %s52 = sadd.s32 %s51, 1
      %s53 = scalar_select %p50, %s51, %s52
      %p56 = pneg %p50
      %p57 = scmp.eq.s32.totalorder %s27, 1
      %p58 = por %p56, %p57
      %p59 = scmp.ne.s32.totalorder %s51, %s54
      %p60 = scmp.eq.s32.totalorder %s27, 0
      %p61 = por %p59, %p60
      %p62 = scmp.ne.s32.totalorder %s51, %s54
      %p63 = scmp.eq.s32.totalorder %s32, 1
      %p64 = por %p62, %p63
      %p65 = scmp.ne.s32.totalorder %s54, %s55
      %p66 = scmp.eq.s32.totalorder %s32, 0
      %p67 = por %p65, %p66
      %p68 = scmp.ne.s32.totalorder %s54, %s55
      %p69 = scmp.eq.s32.totalorder %s33, 1
      %p70 = por %p68, %p69
      %p72 = scmp.ne.s32.totalorder %s55, %s71
      %p73 = scmp.eq.s32.totalorder %s33, 0
      %p74 = por %p72, %p73
      %s76 = sadd.s32 %s75, 1
      %p79 = scmp.eq.s32.totalorder %s27, 1
      %p80 = scmp.ne.s32.totalorder %s75, %s77
      %p81 = scmp.eq.s32.totalorder %s27, 0
      %p82 = por %p80, %p81
      %p83 = scmp.ne.s32.totalorder %s75, %s77
      %p84 = scmp.eq.s32.totalorder %s32, 1
      %p85 = por %p83, %p84
      %p86 = scmp.ne.s32.totalorder %s77, %s78
      %p87 = scmp.eq.s32.totalorder %s32, 0
      %p88 = por %p86, %p87
      %p89 = scmp.ne.s32.totalorder %s77, %s78
      %p90 = scmp.eq.s32.totalorder %s33, 1
      %p91 = por %p89, %p90
      %p93 = scmp.ne.s32.totalorder %s78, %s92
      %p94 = scmp.eq.s32.totalorder %s33, 0
      %p95 = por %p93, %p94
      %s97 = sadd.s32 %s96, 1
      %p100 = scmp.eq.s32.totalorder %s27, 1
      %p101 = scmp.ne.s32.totalorder %s96, %s98
      %p102 = scmp.eq.s32.totalorder %s27, 0
      %p103 = por %p101, %p102
      %p104 = scmp.ne.s32.totalorder %s96, %s98
      %p105 = scmp.eq.s32.totalorder %s32, 1
      %p106 = por %p104, %p105
      %p107 = scmp.ne.s32.totalorder %s98, %s99
      %p108 = scmp.eq.s32.totalorder %s32, 0
      %p109 = por %p107, %p108
      %p110 = scmp.ne.s32.totalorder %s98, %s99
      %p111 = scmp.eq.s32.totalorder %s33, 1
      %p112 = por %p110, %p111
      %p114 = scmp.ne.s32.totalorder %s99, %s113
      %p115 = scmp.eq.s32.totalorder %s33, 0
      %p116 = por %p114, %p115
      %s118 = sadd.s32 %s117, 1
      %p121 = scmp.eq.s32.totalorder %s27, 1
      %p122 = scmp.ne.s32.totalorder %s117, %s119
      %p123 = scmp.eq.s32.totalorder %s27, 0
      %p124 = por %p122, %p123
      %p125 = scmp.ne.s32.totalorder %s117, %s119
      %p126 = scmp.eq.s32.totalorder %s32, 1
      %p127 = por %p125, %p126
      %p128 = scmp.ne.s32.totalorder %s119, %s120
      %p129 = scmp.eq.s32.totalorder %s32, 0
      %p130 = por %p128, %p129
      %p131 = scmp.ne.s32.totalorder %s119, %s120
      %p132 = scmp.eq.s32.totalorder %s33, 1
      %p133 = por %p131, %p132
      %p135 = scmp.ne.s32.totalorder %s120, %s134
      %p136 = scmp.eq.s32.totalorder %s33, 0
      %p137 = por %p135, %p136
      %s139 = sadd.s32 %s138, 1
      %p142 = scmp.eq.s32.totalorder %s27, 1
      %p143 = scmp.ne.s32.totalorder %s138, %s140
      %p144 = scmp.eq.s32.totalorder %s27, 0
      %p145 = por %p143, %p144
      %p146 = scmp.ne.s32.totalorder %s138, %s140
      %p147 = scmp.eq.s32.totalorder %s32, 1
      %p148 = por %p146, %p147
      %p149 = scmp.ne.s32.totalorder %s140, %s141
      %p150 = scmp.eq.s32.totalorder %s32, 0
      %p151 = por %p149, %p150
      %p152 = scmp.ne.s32.totalorder %s140, %s141
      %p153 = scmp.eq.s32.totalorder %s33, 1
      %p154 = por %p152, %p153
      %p156 = scmp.ne.s32.totalorder %s141, %s155
      %p157 = scmp.eq.s32.totalorder %s33, 0
      %p158 = por %p156, %p157
      %s160 = sadd.s32 %s159, 1
      %p163 = scmp.eq.s32.totalorder %s27, 1
      %p164 = scmp.ne.s32.totalorder %s159, %s161
      %p165 = scmp.eq.s32.totalorder %s27, 0
      %p166 = por %p164, %p165
      %p167 = scmp.ne.s32.totalorder %s159, %s161
      %p168 = scmp.eq.s32.totalorder %s32, 1
      %p169 = por %p167, %p168
      %p170 = scmp.ne.s32.totalorder %s161, %s162
      %p171 = scmp.eq.s32.totalorder %s32, 0
      %p172 = por %p170, %p171
      %p173 = scmp.ne.s32.totalorder %s161, %s162
      %p174 = scmp.eq.s32.totalorder %s33, 1
      %p175 = por %p173, %p174
      %p177 = scmp.ne.s32.totalorder %s162, %s176
      %p178 = scmp.eq.s32.totalorder %s33, 0
      %p179 = por %p177, %p178
      %s181 = sadd.s32 %s180, 1
      %p184 = scmp.eq.s32.totalorder %s27, 1
      %p185 = scmp.ne.s32.totalorder %s180, %s182
      %p186 = scmp.eq.s32.totalorder %s27, 0
      %p187 = por %p185, %p186
      %p188 = scmp.ne.s32.totalorder %s180, %s182
      %p189 = scmp.eq.s32.totalorder %s32, 1
      %p190 = por %p188, %p189
      %p191 = scmp.ne.s32.totalorder %s182, %s183
      %p192 = scmp.eq.s32.totalorder %s32, 0
      %p193 = por %p191, %p192
      %p194 = scmp.ne.s32.totalorder %s182, %s183
      %p195 = scmp.eq.s32.totalorder %s33, 1
      %p196 = por %p194, %p195
      %p198 = scmp.ne.s32.totalorder %s183, %s197
      %p199 = scmp.eq.s32.totalorder %s33, 0
      %p200 = por %p198, %p199
      %s201 = ssub.s32 %s34, %s46
      %s202 = ssub.s32 %s35, %s42
      %s203 = sor.u32 %s201, %s202
      %p204 = scmp.eq.s32.totalorder %s203, 0
      %s206 = sadd.s32 %s205, 1
      %s207 = scalar_select %p204, %s205, %s206
      %p210 = pneg %p204
      %p211 = scmp.eq.s32.totalorder %s27, 1
      %p212 = por %p210, %p211
      %p213 = scmp.ne.s32.totalorder %s205, %s208
      %p214 = scmp.eq.s32.totalorder %s27, 0
      %p215 = por %p213, %p214
      %p216 = scmp.ne.s32.totalorder %s205, %s208
      %p217 = scmp.eq.s32.totalorder %s32, 1
      %p218 = por %p216, %p217
      %p219 = scmp.ne.s32.totalorder %s208, %s209
      %p220 = scmp.eq.s32.totalorder %s32, 0
      %p221 = por %p219, %p220
      %p222 = scmp.ne.s32.totalorder %s208, %s209
      %p223 = scmp.eq.s32.totalorder %s33, 1
      %p224 = por %p222, %p223
      %p226 = scmp.ne.s32.totalorder %s209, %s225
      %p227 = scmp.eq.s32.totalorder %s33, 0
      %p228 = por %p226, %p227
      %s229 = ssub.s32 %s34, %s46
      %s230 = ssub.s32 %s35, %s42
      %s231 = sor.u32 %s229, %s230
      %p232 = scmp.eq.s32.totalorder %s231, 0
      %s234 = sadd.s32 %s233, 1
      %s235 = scalar_select %p232, %s233, %s234
      %p238 = pneg %p232
      %p239 = scmp.eq.s32.totalorder %s27, 1
      %p240 = por %p238, %p239
      %p241 = scmp.ne.s32.totalorder %s233, %s236
      %p242 = scmp.eq.s32.totalorder %s27, 0
      %p243 = por %p241, %p242
      %p244 = scmp.ne.s32.totalorder %s233, %s236
      %p245 = scmp.eq.s32.totalorder %s32, 1
      %p246 = por %p244, %p245
      %p247 = scmp.ne.s32.totalorder %s236, %s237
      %p248 = scmp.eq.s32.totalorder %s32, 0
      %p249 = por %p247, %p248
      %p250 = scmp.ne.s32.totalorder %s236, %s237
      %p251 = scmp.eq.s32.totalorder %s33, 1
      %p252 = por %p250, %p251
      %p254 = scmp.ne.s32.totalorder %s237, %s253
      %p255 = scmp.eq.s32.totalorder %s33, 0
      %p256 = por %p254, %p255
      %s257 = ssub.s32 %s34, %s46
      %s258 = ssub.s32 %s35, %s42
      %s259 = sor.u32 %s257, %s258
      %p260 = scmp.eq.s32.totalorder %s259, 0
      %s262 = sadd.s32 %s261, 1
      %s263 = scalar_select %p260, %s261, %s262
      %p266 = pneg %p260
      %p267 = scmp.eq.s32.totalorder %s27, 1
      %p268 = por %p266, %p267
      %p269 = scmp.ne.s32.totalorder %s261, %s264
      %p270 = scmp.eq.s32.totalorder %s27, 0
      %p271 = por %p269, %p270
      %p272 = scmp.ne.s32.totalorder %s261, %s264
      %p273 = scmp.eq.s32.totalorder %s32, 1
      %p274 = por %p272, %p273
      %p275 = scmp.ne.s32.totalorder %s264, %s265
      %p276 = scmp.eq.s32.totalorder %s32, 0
      %p277 = por %p275, %p276
      %p278 = scmp.ne.s32.totalorder %s264, %s265
      %p279 = scmp.eq.s32.totalorder %s33, 1
      %p280 = por %p278, %p279
      %p282 = scmp.ne.s32.totalorder %s265, %s281
      %p283 = scmp.eq.s32.totalorder %s33, 0
      %p284 = por %p282, %p283
      %p285 = scmp.le.s32.totalorder 1, %s27
      %p286 = scmp.lt.s32.totalorder %s27, 3
      %p287 = pnand %p285, %p286
      %p288 = pneg %p287
      // Predicated region
      $region9: #{tpu_custom_call.1} parent=5 // pred_check
        _
      $region10: #{tpu_custom_call.1} parent=5 // pred_check_branch
        %290 = sbr.rel (%p287) target = $region12
      $region11: #{tpu_custom_call.1} parent=5 // pred_region
        %s291 = ssub.s32 %s27, 1
        // Predicated region
        $region13: #{tpu_custom_call.1} parent=11 // pred_check
          %p292 = pneg %p88
        $region14: #{tpu_custom_call.1} parent=11 // pred_check_branch
          %294 = sbr.rel (%p292) target = $region16
        $region15: #{tpu_custom_call.1} parent=11 // pred_region
          %296 = vsyncadd [#allocation6], 0
          %s297 = sshll.u32 %s1, 4
          %s298 = int_to_ptr.hbm [resolvable:$true] %s297
          %s299 = sshll.u32 [#allocation5], 4
          %s300 = int_to_ptr.vmem [resolvable:$true] %s299
          %305 = dma.hbm_to_vmem [thread:$0]  %s298, 256, %s300, [#allocation6], 64, 64, 4
        $region16: #{tpu_custom_call.1} parent=11 // pred_fallthru
          _
        // Predicated region
        $region17: #{tpu_custom_call.1} parent=11 // pred_check
          %p306 = pneg %p109
        $region18: #{tpu_custom_call.1} parent=11 // pred_check_branch
          %308 = sbr.rel (%p306) target = $region20
        $region19: #{tpu_custom_call.1} parent=11 // pred_region
          %310 = vsyncadd [#allocation6], 0
          %s311 = sshll.u32 %s2, 4
          %s312 = int_to_ptr.hbm [resolvable:$true] %s311
          %s313 = sshll.u32 [#allocation7], 4
          %s314 = int_to_ptr.vmem [resolvable:$true] %s313
          %319 = dma.hbm_to_vmem [thread:$0]  %s312, 256, %s314, [#allocation6], 64, 64, 4
        $region20: #{tpu_custom_call.1} parent=11 // pred_fallthru
          _
        // Predicated region
        $region21: #{tpu_custom_call.1} parent=11 // pred_check
          %p320 = pneg %p130
        $region22: #{tpu_custom_call.1} parent=11 // pred_check_branch
          %322 = sbr.rel (%p320) target = $region24
        $region23: #{tpu_custom_call.1} parent=11 // pred_region
          %324 = vsyncadd [#allocation9], 0
          %s325 = sshll.u32 %s3, 4
          %s326 = int_to_ptr.hbm [resolvable:$true] %s325
          %s327 = sshll.u32 [#allocation8], 4
          %s328 = int_to_ptr.vmem [resolvable:$true] %s327
          %333 = dma.hbm_to_vmem [thread:$0]  %s326, 256, %s328, [#allocation9], 64, 64, 4
        $region24: #{tpu_custom_call.1} parent=11 // pred_fallthru
          _
        // Predicated region
        $region25: #{tpu_custom_call.1} parent=11 // pred_check
          %p334 = pneg %p151
        $region26: #{tpu_custom_call.1} parent=11 // pred_check_branch
          %336 = sbr.rel (%p334) target = $region28
        $region27: #{tpu_custom_call.1} parent=11 // pred_region
          _
        $region28: #{tpu_custom_call.1} parent=11 // pred_fallthru
          _
        // Predicated region
        $region29: #{tpu_custom_call.1} parent=11 // pred_check
          %p337 = pneg %p172
        $region30: #{tpu_custom_call.1} parent=11 // pred_check_branch
          %339 = sbr.rel (%p337) target = $region32
        $region31: #{tpu_custom_call.1} parent=11 // pred_region
          _
        $region32: #{tpu_custom_call.1} parent=11 // pred_fallthru
          _
        // Predicated region
        $region33: #{tpu_custom_call.1} parent=11 // pred_check
          %p340 = pneg %p193
        $region34: #{tpu_custom_call.1} parent=11 // pred_check_branch
          %342 = sbr.rel (%p340) target = $region36
        $region35: #{tpu_custom_call.1} parent=11 // pred_region
          _
        $region36: #{tpu_custom_call.1} parent=11 // pred_fallthru
          _
      $region12: #{tpu_custom_call.1} parent=5 // pred_fallthru
        _
      %p343 = scmp.lt.s32.totalorder %s27, 2
      // Predicated region
      $region37: #{tpu_custom_call.1} parent=5 // pred_check
        %p344 = pneg %p343
      $region38: #{tpu_custom_call.1} parent=5 // pred_check_branch
        %346 = sbr.rel (%p344) target = $region40
      $region39: #{tpu_custom_call.1} parent=5 // pred_region
        // Predicated region
        $region41: #{tpu_custom_call.1} parent=39 // pred_check
          %p347 = pneg %p61
        $region42: #{tpu_custom_call.1} parent=39 // pred_check_branch
          %349 = sbr.rel (%p347) target = $region44
        $region43: #{tpu_custom_call.1} parent=39 // pred_region
          %s350 = sand.u32 %s51, 1
          %s351 = scalar_lea.sflag [#allocation3], %s350
          %s352 = sand.u32 %s51, 1
          %s353 = smul.addr %s352, 4
          %s354 = scalar_lea.vmem [#allocation2], %s353
          %356 = vsyncadd %s351, 0
          %s357 = sadd.s32 %s35, %s34
          %s358 = smul.addr %s357, 4
          %s359 = scalar_lea.hbm %s0, %s358
          %s361 = sshll.u32 %s359, 4
          %s362 = int_to_ptr.hbm [resolvable:$true] %s361
          %s363 = sshll.u32 %s354, 4
          %s364 = int_to_ptr.vmem [resolvable:$true] %s363
          %366 = dma.hbm_to_vmem [thread:$0]  %s362, 64, %s364, %s351
        $region44: #{tpu_custom_call.1} parent=39 // pred_fallthru
          _
      $region40: #{tpu_custom_call.1} parent=5 // pred_fallthru
        _
      %p367 = scmp.le.s32.totalorder 1, %s27
      %p368 = scmp.lt.s32.totalorder %s27, 3
      %p369 = pnand %p367, %p368
      %p370 = pneg %p369
      // Predicated region
      $region45: #{tpu_custom_call.1} parent=5 // pred_check
        _
      $region46: #{tpu_custom_call.1} parent=5 // pred_check_branch
        %372 = sbr.rel (%p369) target = $region48
      $region47: #{tpu_custom_call.1} parent=5 // pred_region
        %s373 = ssub.s32 %s27, 1
        %s374 = sand.u32 %s54, 1
        %s375 = scalar_lea.sflag [#allocation3], %s374
        %s376 = sand.u32 %s54, 1
        %s377 = smul.addr %s376, 4
        %s378 = scalar_lea.vmem [#allocation2], %s377
        // Predicated region
        $region49: #{tpu_custom_call.1} parent=47 // pred_check
          %p379 = pneg %p67
        $region50: #{tpu_custom_call.1} parent=47 // pred_check_branch
          %381 = sbr.rel (%p379) target = $region52
        $region51: #{tpu_custom_call.1} parent=47 // pred_region
          %383 = dma.done %s375, 64
        $region52: #{tpu_custom_call.1} parent=47 // pred_fallthru
          _
        // Predicated region
        $region53: #{tpu_custom_call.1} parent=47 // pred_check
          %p384 = pneg %p88
        $region54: #{tpu_custom_call.1} parent=47 // pred_check_branch
          %386 = sbr.rel (%p384) target = $region56
        $region55: #{tpu_custom_call.1} parent=47 // pred_region
          %388 = dma.done [#allocation6], 256
        $region56: #{tpu_custom_call.1} parent=47 // pred_fallthru
          _
        // Predicated region
        $region57: #{tpu_custom_call.1} parent=47 // pred_check
          %p389 = pneg %p109
        $region58: #{tpu_custom_call.1} parent=47 // pred_check_branch
          %391 = sbr.rel (%p389) target = $region60
        $region59: #{tpu_custom_call.1} parent=47 // pred_region
          %393 = dma.done [#allocation6], 256
        $region60: #{tpu_custom_call.1} parent=47 // pred_fallthru
          _
        // Predicated region
        $region61: #{tpu_custom_call.1} parent=47 // pred_check
          %p394 = pneg %p130
        $region62: #{tpu_custom_call.1} parent=47 // pred_check_branch
          %396 = sbr.rel (%p394) target = $region64
        $region63: #{tpu_custom_call.1} parent=47 // pred_region
          %398 = dma.done [#allocation9], 256
        $region64: #{tpu_custom_call.1} parent=47 // pred_fallthru
          _
        %s399 = sand.u32 %s54, 1
        %s400 = scalar_lea.sflag [#allocation3], %s399
        %s401 = sand.u32 %s54, 1
        %s402 = smul.addr %s401, 4
        %s403 = scalar_lea.vmem [#allocation2], %s402
        %p404 = pneg %p67
        %p405 = pneg %p64
        %p406 = pneg %p88
        %p407 = pneg %p85
        %p408 = pneg %p109
        %p409 = pneg %p106
        %p410 = pneg %p130
        %p411 = pneg %p127
        %p412 = pneg %p151
        %p413 = pneg %p148
        %p414 = pneg %p172
        %p415 = pneg %p169
        %p416 = pneg %p193
        %p417 = pneg %p190
        %p418 = pneg %p221
        %p419 = pneg %p218
        %s420 = sand.u32 %s208, 1
        %s421 = scalar_lea.sflag [#allocation4], %s420
        %s422 = sand.u32 %s208, 1
        %s423 = smul.addr %s422, 4
        %s424 = scalar_lea.vmem [#allocation10], %s423
        %p425 = pneg %p249
        %p426 = pneg %p246
        %s427 = sand.u32 %s32, 1
        %s428 = scalar_lea.sflag [#allocation12], %s427
        %s429 = sand.u32 %s236, 1
        %s430 = smul.addr %s429, 4
        %s431 = scalar_lea.vmem [#allocation11], %s430
        %p432 = pneg %p277
        %p433 = pneg %p274
        %s434 = sand.u32 %s32, 1
        %s435 = scalar_lea.sflag [#allocation12], %s434
        %s436 = sand.u32 %s264, 1
        %s437 = smul.addr %s436, 4
        %s438 = scalar_lea.vmem [#allocation13], %s437
        %v440 = vld [vmem:[%s378] sm:$0xf]
        %v441 = vld [vmem:[#allocation5] sm:$0xf]
        %v442 = vld [vmem:[#allocation5 + $0x4] sm:$0xf]
        %v443 = vld [vmem:[#allocation5 + $0x8] sm:$0xf]
        %v444 = vld [vmem:[#allocation5 + $0xc] sm:$0xf]
        %v445 = vld [vmem:[%s4] sm:$0x1]
        %v447 = vperm.slane %v445, 0
        %v453 = vunpack.c.l.b16 %v441
        %v454 = vunpack.c.l.b16 %v442
        %v455 = vunpack.c.l.b16 %v443
        %v456 = vunpack.c.l.b16 %v444
        %v457 = vpack.c.b16 %v454, %v453
        %v458 = vpack.c.b16 %v456, %v455
        %vm461 = vcmask 261120
        %v463 = vsel %vm461, %v440, 0
        %465 = vmatpush.bf16.msra.mxu0 0
        %466 = vmatpush.bf16.msra.mxu0 0
        %467 = vmatpush.bf16.msra.mxu0 0
        %468 = vmatpush.bf16.msra.mxu0 0
        %469 = vmatpush.bf16.msra.mxu0 0
        %470 = vmatpush.bf16.msra.mxu0 0
        %471 = vmatpush.bf16.msra.mxu0 %v458
        %472 = vmatpush.bf16.msra.mxu0 %v457
        %473 = vmatmul.bf16.gmra.mxu0 %v463
        %v474 = vpop.f32.mrf.mxu0
        %v475 = vadd.f32 %v447, %v474
        %v476 = vpop.f32.mrf.mxu0
        %477 = vdwg.mxu0
        %v478 = vld [vmem:[#allocation7] sm:$0xf]
        %v479 = vld [vmem:[#allocation7 + $0x4] sm:$0xf]
        %v480 = vld [vmem:[#allocation7 + $0x8] sm:$0xf]
        %v481 = vld [vmem:[#allocation7 + $0xc] sm:$0xf]
        %v482 = vld [vmem:[%s5] sm:$0x1]
        %v484 = vperm.slane %v482, 0
        %v490 = vunpack.c.l.b16 %v478
        %v491 = vunpack.c.l.b16 %v479
        %v492 = vunpack.c.l.b16 %v480
        %v493 = vunpack.c.l.b16 %v481
        %v494 = vpack.c.b16 %v491, %v490
        %v495 = vpack.c.b16 %v493, %v492
        %498 = vmatpush.bf16.msra.mxu0 0
        %499 = vmatpush.bf16.msra.mxu0 0
        %500 = vmatpush.bf16.msra.mxu0 0
        %501 = vmatpush.bf16.msra.mxu0 0
        %502 = vmatpush.bf16.msra.mxu0 0
        %503 = vmatpush.bf16.msra.mxu0 0
        %504 = vmatpush.bf16.msra.mxu0 %v495
        %505 = vmatpush.bf16.msra.mxu0 %v494
        %506 = vmatmul.bf16.gmra.mxu0 %v463
        %v507 = vpop.f32.mrf.mxu0
        %v508 = vadd.f32 %v484, %v507
        %v509 = vpop.f32.mrf.mxu0
        %510 = vdwg.mxu0
        %v511 = vld [vmem:[#allocation8] sm:$0xf]
        %v512 = vld [vmem:[#allocation8 + $0x4] sm:$0xf]
        %v513 = vld [vmem:[#allocation8 + $0x8] sm:$0xf]
        %v514 = vld [vmem:[#allocation8 + $0xc] sm:$0xf]
        %v515 = vld [vmem:[%s6] sm:$0x1]
        %v517 = vperm.slane %v515, 0
        %v523 = vunpack.c.l.b16 %v511
        %v524 = vunpack.c.l.b16 %v512
        %v525 = vunpack.c.l.b16 %v513
        %v526 = vunpack.c.l.b16 %v514
        %v527 = vpack.c.b16 %v524, %v523
        %v528 = vpack.c.b16 %v526, %v525
        %531 = vmatpush.bf16.msra.mxu0 0
        %532 = vmatpush.bf16.msra.mxu0 0
        %533 = vmatpush.bf16.msra.mxu0 0
        %534 = vmatpush.bf16.msra.mxu0 0
        %535 = vmatpush.bf16.msra.mxu0 0
        %536 = vmatpush.bf16.msra.mxu0 0
        %537 = vmatpush.bf16.msra.mxu0 %v528
        %538 = vmatpush.bf16.msra.mxu0 %v527
        %539 = vmatmul.bf16.gmra.mxu0 %v463
        %v540 = vpop.f32.mrf.mxu0
        %v541 = vadd.f32 %v517, %v540
        %v542 = vpop.f32.mrf.mxu0
        %543 = vdwg.mxu0
        %v544 = vpack.c.bf16 %v475, %v475
        %vm545 = vcmask 257024
        %546 = vst.msk [vmem:[%s424] sm:$0xf] %vm545, %v544
        %v547 = vpack.c.bf16 %v508, %v508
        %548 = vst.msk [vmem:[%s431] sm:$0xf] %vm545, %v547
        %v549 = vpack.c.bf16 %v541, %v541
        %550 = vst.msk [vmem:[%s438] sm:$0xf] %vm545, %v549
        %s551 = sand.u32 %s208, 1
        %s552 = scalar_lea.sflag [#allocation4], %s551
        %s553 = sand.u32 %s208, 1
        %s554 = smul.addr %s553, 4
        %s555 = scalar_lea.vmem [#allocation10], %s554
        %s556 = sand.u32 %s32, 1
        %s557 = scalar_lea.sflag [#allocation12], %s556
        %s558 = sand.u32 %s236, 1
        %s559 = smul.addr %s558, 4
        %s560 = scalar_lea.vmem [#allocation11], %s559
        %s561 = sand.u32 %s32, 1
        %s562 = scalar_lea.sflag [#allocation12], %s561
        %s563 = sand.u32 %s264, 1
        %s564 = smul.addr %s563, 4
        %s565 = scalar_lea.vmem [#allocation13], %s564
        // Predicated region
        $region65: #{tpu_custom_call.1} parent=47 // pred_check
          %p566 = pneg %p218
        $region66: #{tpu_custom_call.1} parent=47 // pred_check_branch
          %568 = sbr.rel (%p566) target = $region68
        $region67: #{tpu_custom_call.1} parent=47 // pred_region
          %570 = vsyncadd %s552, 0
          %s571 = sadd.s32 %s37, %s36
          %s572 = smul.addr %s571, 4
          %s573 = scalar_lea.hbm %s7, %s572
          %s575 = sshll.u32 %s555, 4
          %s576 = int_to_ptr.vmem [resolvable:$true] %s575
          %s577 = sshll.u32 %s573, 4
          %s578 = int_to_ptr.hbm [resolvable:$true] %s577
          %580 = dma.vmem_to_hbm [thread:$0]  %s576, 64, %s578, %s552
        $region68: #{tpu_custom_call.1} parent=47 // pred_fallthru
          _
        // Predicated region
        $region69: #{tpu_custom_call.1} parent=47 // pred_check
          %p581 = pneg %p246
        $region70: #{tpu_custom_call.1} parent=47 // pred_check_branch
          %583 = sbr.rel (%p581) target = $region72
        $region71: #{tpu_custom_call.1} parent=47 // pred_region
          %585 = vsyncadd %s557, 0
          %s586 = sadd.s32 %s37, %s36
          %s587 = smul.addr %s586, 4
          %s588 = scalar_lea.hbm %s8, %s587
          %s590 = sshll.u32 %s560, 4
          %s591 = int_to_ptr.vmem [resolvable:$true] %s590
          %s592 = sshll.u32 %s588, 4
          %s593 = int_to_ptr.hbm [resolvable:$true] %s592
          %595 = dma.vmem_to_hbm [thread:$0]  %s591, 64, %s593, %s557
        $region72: #{tpu_custom_call.1} parent=47 // pred_fallthru
          _
        // Predicated region
        $region73: #{tpu_custom_call.1} parent=47 // pred_check
          %p596 = pneg %p274
        $region74: #{tpu_custom_call.1} parent=47 // pred_check_branch
          %598 = sbr.rel (%p596) target = $region76
        $region75: #{tpu_custom_call.1} parent=47 // pred_region
          %600 = vsyncadd %s562, 0
          %s601 = sadd.s32 %s37, %s36
          %s602 = smul.addr %s601, 4
          %s603 = scalar_lea.hbm %s9, %s602
          %s605 = sshll.u32 %s565, 4
          %s606 = int_to_ptr.vmem [resolvable:$true] %s605
          %s607 = sshll.u32 %s603, 4
          %s608 = int_to_ptr.hbm [resolvable:$true] %s607
          %610 = dma.vmem_to_hbm [thread:$0]  %s606, 64, %s608, %s562
        $region76: #{tpu_custom_call.1} parent=47 // pred_fallthru
          _
      $region48: #{tpu_custom_call.1} parent=5 // pred_fallthru
        _
      %p611 = scmp.le.s32.totalorder 2, %s27
      // Predicated region
      $region77: #{tpu_custom_call.1} parent=5 // pred_check
        %p612 = pneg %p611
      $region78: #{tpu_custom_call.1} parent=5 // pred_check_branch
        %614 = sbr.rel (%p612) target = $region80
      $region79: #{tpu_custom_call.1} parent=5 // pred_region
        %s615 = ssub.s32 %s27, 2
        // Predicated region
        $region81: #{tpu_custom_call.1} parent=79 // pred_check
          %p616 = pneg %p224
        $region82: #{tpu_custom_call.1} parent=79 // pred_check_branch
          %618 = sbr.rel (%p616) target = $region84
        $region83: #{tpu_custom_call.1} parent=79 // pred_region
          %s619 = sand.u32 %s209, 1
          %s620 = scalar_lea.sflag [#allocation4], %s619
          %s621 = sand.u32 %s209, 1
          %s622 = smul.addr %s621, 4
          %s623 = scalar_lea.vmem [#allocation10], %s622
          %625 = dma.done %s620, 64
        $region84: #{tpu_custom_call.1} parent=79 // pred_fallthru
          _
        // Predicated region
        $region85: #{tpu_custom_call.1} parent=79 // pred_check
          %p626 = pneg %p252
        $region86: #{tpu_custom_call.1} parent=79 // pred_check_branch
          %628 = sbr.rel (%p626) target = $region88
        $region87: #{tpu_custom_call.1} parent=79 // pred_region
          %s629 = sand.u32 %s33, 1
          %s630 = scalar_lea.sflag [#allocation12], %s629
          %s631 = sand.u32 %s237, 1
          %s632 = smul.addr %s631, 4
          %s633 = scalar_lea.vmem [#allocation11], %s632
          %635 = dma.done %s630, 64
        $region88: #{tpu_custom_call.1} parent=79 // pred_fallthru
          _
        // Predicated region
        $region89: #{tpu_custom_call.1} parent=79 // pred_check
          %p636 = pneg %p280
        $region90: #{tpu_custom_call.1} parent=79 // pred_check_branch
          %638 = sbr.rel (%p636) target = $region92
        $region91: #{tpu_custom_call.1} parent=79 // pred_region
          %s639 = sand.u32 %s33, 1
          %s640 = scalar_lea.sflag [#allocation12], %s639
          %s641 = sand.u32 %s265, 1
          %s642 = smul.addr %s641, 4
          %s643 = scalar_lea.vmem [#allocation13], %s642
          %645 = dma.done %s640, 64
        $region92: #{tpu_custom_call.1} parent=79 // pred_fallthru
          _
      $region80: #{tpu_custom_call.1} parent=5 // pred_fallthru
        _
    $region6: #{tpu_custom_call.1} parent=1 // loop_footer
      %s31 = sadd.s32 1, %s27
    $region7: #{tpu_custom_call.1} parent=1 // loop_footer_branch
      %26 = sbr.rel target = $region3
    $region8: #{tpu_custom_call.1} parent=1 // loop_exit
      _
    %646 = vsyncpa [#allocation3], 1
    %s647 = scalar_lea.sflag [#allocation3], 1
    %648 = vsyncpa %s647, 1
    %649 = vsyncpa [#allocation6], 1
    %650 = vsyncpa [#allocation9], 1
    %651 = vsyncpa [#allocation4], 1
    %s652 = scalar_lea.sflag [#allocation4], 1
    %653 = vsyncpa %s652, 1
    %654 = vsyncpa [#allocation12], 1
    %s655 = scalar_lea.sflag [#allocation12], 1
    %656 = vsyncpa %s655, 1

</llo_original>
